<compile_context>
chip_gen: v7x
topology: tpu7x:2x2x1
jax: 0.10.0
libtpu: 0.0.40
codegen_flags: <defaults>
</compile_context>

<pallas_src>
import functools

import jax
import jax.numpy as jnp
from jax import lax
from jax.experimental import pallas as pl
from jax.experimental.pallas import tpu as pltpu


def _cdiv(a, b):
    return (a + b - 1) // b


def _round_up(a, b):
    return _cdiv(a, b) * b


def _vmem_capacity_bytes():
    """Chip VMEM capacity; conservative (v7x per-TC) fallback if unknown."""
    try:
        info = pltpu.get_tpu_info()
        cap = getattr(info, "vmem_capacity_bytes", None)
        if cap:
            return int(cap)
    except Exception:
        pass
    return 64 * 1024 * 1024


def _distill_kl_kernel(ys_ref, yt_ref, loss_ref, acc_ref, *,
                       inv_t, scale, batch, tile_rows, need_row_mask):
    """Processes one (tb, C) batch tile of both logit tensors."""
    i = pl.program_id(0)

    @pl.when(i == 0)
    def _init():
        acc_ref[...] = jnp.zeros_like(acc_ref)

    ys = ys_ref[...].astype(jnp.float32)
    yt = yt_ref[...].astype(jnp.float32)

    # Student: only the logsumexp normalizer is needed (log_p_s never built).
    # (x - max(x)) * inv_t == x*inv_t - max(x*inv_t) since inv_t > 0.
    ys_shift = (ys - jnp.max(ys, axis=1, keepdims=True)) * inv_t
    log_z_s = jnp.log(jnp.sum(jnp.exp(ys_shift), axis=1, keepdims=True))

    # Teacher: shifted exponentials + normalizer.
    yt_shift = (yt - jnp.max(yt, axis=1, keepdims=True)) * inv_t
    exp_t = jnp.exp(yt_shift)
    z_t = jnp.sum(exp_t, axis=1, keepdims=True)

    # KL_row = (1/z_t)*sum_c exp_t*(yt_shift - ys_shift) + (log z_s - log z_t)
    num = jnp.sum(exp_t * (yt_shift - ys_shift), axis=1, keepdims=True)
    row_kl = num * pl.reciprocal(z_t) + (log_z_s - jnp.log(z_t))

    if need_row_mask:
        # Ragged last tile: rows >= batch hold undefined (boundary) data; the
        # select zeroes their contribution regardless of NaN/Inf garbage.
        rows = i * tile_rows + lax.broadcasted_iota(jnp.int32, row_kl.shape, 0)
        row_kl = jnp.where(rows < batch, row_kl, 0.0)

    acc_ref[...] += row_kl

    @pl.when(i == pl.num_programs(0) - 1)
    def _finalize():
        loss_ref[0, 0] = jnp.sum(acc_ref[...]) * scale


def distill_kl(y_s, y_t, temperature, *, block_rows=None):
    """KL distillation loss. y_s, y_t: [B, C] logits. Returns f32 scalar.

    Consumes logits in their native dtype; feeding bf16 halves HBM traffic.
    """
    assert y_s.shape == y_t.shape and y_s.ndim == 2
    B, C = y_s.shape
    itemsize = jnp.dtype(y_s.dtype).itemsize

    # VMEM limit from the actual chip capacity (leave headroom for compiler
    # scratch): 128 MiB (v5e/v6e) -> 96 MiB, 64 MiB (v7x) -> 48 MiB.
    vmem_limit = min((_vmem_capacity_bytes() * 3) // 4, 96 * 1024 * 1024)

    if block_rows is None:
        # Per tile row: 2 inputs x 2 pipeline buffers (native dtype) plus
        # ~6 f32 full-tile intermediates (casts, shifts, exp_t, product).
        per_row_bytes = 2 * 2 * C * itemsize + 6 * C * 4
        tb = (vmem_limit // 2) // per_row_bytes
        tb = max(16, min(1024, (tb // 16) * 16))
    else:
        tb = max(16, _round_up(int(block_rows), 16))

    if tb >= B:
        tb = B                      # single tile == full array (no constraint)
        need_row_mask = False
    else:
        need_row_mask = (B % tb) != 0
    n_tiles = _cdiv(B, tb)

    kernel = functools.partial(
        _distill_kl_kernel,
        inv_t=1.0 / float(temperature),
        scale=float(temperature) ** 2 / float(B),
        batch=B,
        tile_rows=tb,
        need_row_mask=need_row_mask,
    )

    cost = pl.CostEstimate(
        flops=12 * B * C,
        transcendentals=2 * B * C + 3 * B,
        bytes_accessed=2 * B * C * itemsize + 4,
    )

    loss = pl.pallas_call(
        kernel,
        out_shape=jax.ShapeDtypeStruct((1, 1), jnp.float32),
        grid=(n_tiles,),
        in_specs=[
            pl.BlockSpec((tb, C), lambda i: (i, 0)),
            pl.BlockSpec((tb, C), lambda i: (i, 0)),
        ],
        out_specs=pl.BlockSpec((1, 1), lambda i: (0, 0),
                               memory_space=pltpu.MemorySpace.SMEM),
        scratch_shapes=[pltpu.VMEM((tb, 1), jnp.float32)],
        compiler_params=pltpu.CompilerParams(
            dimension_semantics=("arbitrary",),
            vmem_limit_bytes=int(vmem_limit),
        ),
        cost_estimate=cost,
    )(y_s, y_t)
    return loss[0, 0]


def _distill_kl_ref(y_s, y_t, temperature):
    T = float(temperature)
    log_p_s = jax.nn.log_softmax(y_s.astype(jnp.float32) / T, axis=1)
    p_t = jax.nn.softmax(y_t.astype(jnp.float32) / T, axis=1)
    log_p_t = jax.nn.log_softmax(y_t.astype(jnp.float32) / T, axis=1)
    return jnp.sum(p_t * (log_p_t - log_p_s)) * (T * T) / y_s.shape[0]


if __name__ == "__main__":
    key = jax.random.PRNGKey(0)
    k1, k2, k3, k4, k5, k6 = jax.random.split(key, 6)
    T = 4.0

    # Case 1: unaligned C, forced small tiles -> 3-tile grid with a ragged
    # (masked) last tile; exercises init / accumulate / mask / finalize.
    B1, C1 = 40, 200
    y_s1 = jax.random.normal(k1, (B1, C1), dtype=jnp.float32)
    y_t1 = jax.random.normal(k2, (B1, C1), dtype=jnp.float32)
    loss1 = distill_kl(y_s1, y_t1, T, block_rows=16)
    jax.block_until_ready(loss1)
    ref1 = _distill_kl_ref(y_s1, y_t1, T)
    assert jnp.allclose(loss1, ref1, rtol=1e-4, atol=1e-5), (loss1, ref1)

    # Case 2: aligned bf16 logits, automatic tile size (single tile).
    B2, C2 = 32, 128
    y_s2 = jax.random.normal(k3, (B2, C2), dtype=jnp.float32).astype(jnp.bfloat16)
    y_t2 = jax.random.normal(k4, (B2, C2), dtype=jnp.float32).astype(jnp.bfloat16)
    loss2 = distill_kl(y_s2, y_t2, T)
    jax.block_until_ready(loss2)
    ref2 = _distill_kl_ref(y_s2, y_t2, T)
    assert jnp.allclose(loss2, ref2, rtol=1e-4, atol=1e-5), (loss2, ref2)

    # Case 3: tiny, fully unaligned single-tile case (full-array block).
    B3, C3 = 2, 10
    y_s3 = jax.random.normal(k5, (B3, C3), dtype=jnp.float32)
    y_t3 = jax.random.normal(k6, (B3, C3), dtype=jnp.float32)
    loss3 = distill_kl(y_s3, y_t3, 2.0)
    jax.block_until_ready(loss3)
    ref3 = _distill_kl_ref(y_s3, y_t3, 2.0)
    assert jnp.allclose(loss3, ref3, rtol=1e-4, atol=1e-5), (loss3, ref3)

    print("KERNEL_OK")
</pallas_src>

<mosaic_0001>
module attributes {stable_mosaic.version = 11 : i64} {
  func.func @_distill_kl_kernel(%arg0: i32, %arg1: memref<16x200xf32, #tpu.memory_space<vmem>>, %arg2: memref<16x200xf32, #tpu.memory_space<vmem>>, %arg3: memref<1x1xf32, #tpu.memory_space<smem>>, %arg4: memref<16x1xf32, #tpu.memory_space<vmem>>) attributes {dimension_semantics = [#tpu.dimension_semantics<arbitrary>], iteration_bounds = array<i64: 3>, scalar_prefetch = 0 : i64, scratch_operands = 1 : i64, tpu.core_type = #tpu.core_type<tc>, window_params = [{transform_indices = @transform_0, window_bounds = array<i64: 16, 200>}, {transform_indices = @transform_1, window_bounds = array<i64: 16, 200>}, {transform_indices = @transform_2, window_bounds = array<i64: 1, 1>}]} {
    %c0_i32 = arith.constant 0 : i32
    %0 = arith.cmpi eq, %arg0, %c0_i32 : i32
    %1 = arith.extui %0 : i1 to i32
    %c0_i32_0 = arith.constant 0 : i32
    %2 = arith.cmpi ne, %1, %c0_i32_0 : i32
    scf.if %2 {
      %cst_16 = arith.constant 0.000000e+00 : f32
      %47 = vector.broadcast %cst_16 : f32 to vector<16x1xf32>
      %c0_17 = arith.constant 0 : index
      %c0_18 = arith.constant 0 : index
      %48 = vector.load %arg4[%c0_17, %c0_18] : memref<16x1xf32, #tpu.memory_space<vmem>>, vector<16x1xf32>
      tpu.vector_store %arg4[%c0_17, %c0_18], %47 {strides = array<i32>} : memref<16x1xf32, #tpu.memory_space<vmem>>, vector<16x1xf32>,
    } else {
    }
    %c0 = arith.constant 0 : index
    %c0_1 = arith.constant 0 : index
    %3 = vector.load %arg1[%c0, %c0_1] : memref<16x200xf32, #tpu.memory_space<vmem>>, vector<16x200xf32>
    %c0_2 = arith.constant 0 : index
    %c0_3 = arith.constant 0 : index
    %4 = vector.load %arg2[%c0_2, %c0_3] : memref<16x200xf32, #tpu.memory_space<vmem>>, vector<16x200xf32>
    %cst = arith.constant dense<0xFF800000> : vector<16xf32>
    %5 = vector.multi_reduction <maximumf>, %3, %cst [1] : vector<16x200xf32> to vector<16xf32>
    %6 = vector.shape_cast %5 : vector<16xf32> to vector<16x1xf32>
    %7 = vector.broadcast %6 : vector<16x1xf32> to vector<16x200xf32>
    %8 = arith.subf %3, %7 : vector<16x200xf32>
    %cst_4 = arith.constant 2.500000e-01 : f32
    %9 = vector.broadcast %cst_4 : f32 to vector<16x200xf32>
    %10 = arith.mulf %8, %9 : vector<16x200xf32>
    %11 = math.exp %10 : vector<16x200xf32>
    %cst_5 = arith.constant dense<0.000000e+00> : vector<16xf32>
    %12 = vector.multi_reduction <add>, %11, %cst_5 [1] : vector<16x200xf32> to vector<16xf32>
    %13 = vector.shape_cast %12 : vector<16xf32> to vector<16x1xf32>
    %14 = math.log %13 : vector<16x1xf32>
    %cst_6 = arith.constant dense<0xFF800000> : vector<16xf32>
    %15 = vector.multi_reduction <maximumf>, %4, %cst_6 [1] : vector<16x200xf32> to vector<16xf32>
    %16 = vector.shape_cast %15 : vector<16xf32> to vector<16x1xf32>
    %17 = vector.broadcast %16 : vector<16x1xf32> to vector<16x200xf32>
    %18 = arith.subf %4, %17 : vector<16x200xf32>
    %cst_7 = arith.constant 2.500000e-01 : f32
    %19 = vector.broadcast %cst_7 : f32 to vector<16x200xf32>
    %20 = arith.mulf %18, %19 : vector<16x200xf32>
    %21 = math.exp %20 : vector<16x200xf32>
    %cst_8 = arith.constant dense<0.000000e+00> : vector<16xf32>
    %22 = vector.multi_reduction <add>, %21, %cst_8 [1] : vector<16x200xf32> to vector<16xf32>
    %23 = vector.shape_cast %22 : vector<16xf32> to vector<16x1xf32>
    %24 = arith.subf %20, %10 : vector<16x200xf32>
    %25 = arith.mulf %21, %24 : vector<16x200xf32>
    %cst_9 = arith.constant dense<0.000000e+00> : vector<16xf32>
    %26 = vector.multi_reduction <add>, %25, %cst_9 [1] : vector<16x200xf32> to vector<16xf32>
    %27 = vector.shape_cast %26 : vector<16xf32> to vector<16x1xf32>
    %28 = tpu.reciprocal %23 : vector<16x1xf32> -> vector<16x1xf32>
    %29 = arith.mulf %27, %28 : vector<16x1xf32>
    %30 = math.log %23 : vector<16x1xf32>
    %31 = arith.subf %14, %30 : vector<16x1xf32>
    %32 = arith.addf %29, %31 : vector<16x1xf32>
    %c16_i32 = arith.constant 16 : i32
    %33 = arith.muli %arg0, %c16_i32 : i32
    %34 = tpu.iota {dimensions = array<i32: 0>} : vector<16x1xi32>
    %35 = vector.broadcast %33 : i32 to vector<16x1xi32>
    %36 = arith.addi %35, %34 : vector<16x1xi32>
    %c40_i32 = arith.constant 40 : i32
    %37 = vector.broadcast %c40_i32 : i32 to vector<16x1xi32>
    %38 = arith.cmpi slt, %36, %37 : vector<16x1xi32>
    %cst_10 = arith.constant 0.000000e+00 : f32
    %39 = vector.broadcast %cst_10 : f32 to vector<16x1xf32>
    %40 = arith.select %38, %32, %39 : vector<16x1xi1>, vector<16x1xf32>
    %c0_11 = arith.constant 0 : index
    %c0_12 = arith.constant 0 : index
    %41 = vector.load %arg4[%c0_11, %c0_12] : memref<16x1xf32, #tpu.memory_space<vmem>>, vector<16x1xf32>
    %42 = arith.addf %41, %40 : vector<16x1xf32>
    %c0_13 = arith.constant 0 : index
    %c0_14 = arith.constant 0 : index
    %43 = vector.load %arg4[%c0_13, %c0_14] : memref<16x1xf32, #tpu.memory_space<vmem>>, vector<16x1xf32>
    tpu.vector_store %arg4[%c0_13, %c0_14], %42 {strides = array<i32>} : memref<16x1xf32, #tpu.memory_space<vmem>>, vector<16x1xf32>,
    %c2_i32 = arith.constant 2 : i32
    %44 = arith.cmpi eq, %arg0, %c2_i32 : i32
    %45 = arith.extui %44 : i1 to i32
    %c0_i32_15 = arith.constant 0 : i32
    %46 = arith.cmpi ne, %45, %c0_i32_15 : i32
    scf.if %46 {
      %c0_16 = arith.constant 0 : index
      %c0_17 = arith.constant 0 : index
      %47 = vector.load %arg4[%c0_16, %c0_17] : memref<16x1xf32, #tpu.memory_space<vmem>>, vector<16x1xf32>
      %48 = vector.shape_cast %47 : vector<16x1xf32> to vector<1x16x1xf32>
      %cst_18 = arith.constant dense<0.000000e+00> : vector<1xf32>
      %49 = vector.multi_reduction <add>, %48, %cst_18 [1, 2] : vector<1x16x1xf32> to vector<1xf32>
      %50 = vector.shape_cast %49 : vector<1xf32> to vector<1x1x1xf32>
      %51 = vector.extract %50[0, 0, 0] : f32 from vector<1x1x1xf32>
      %cst_19 = arith.constant 4.000000e-01 : f32
      %52 = arith.mulf %51, %cst_19 : f32
      %c0_20 = arith.constant 0 : index
      %c0_21 = arith.constant 0 : index
      %53 = memref.load %arg3[%c0_20, %c0_21] : memref<1x1xf32, #tpu.memory_space<smem>>
      memref.store %52, %arg3[%c0_20, %c0_21] : memref<1x1xf32, #tpu.memory_space<smem>>
    } else {
    }
    return
  }
  func.func @transform_0(%arg0: i32) -> (i32, i32) {
    %c0_i32 = arith.constant 0 : i32
    %c0_i32_0 = arith.constant 0 : i32
    return %arg0, %c0_i32 : i32, i32
  }
  func.func @transform_1(%arg0: i32) -> (i32, i32) {
    %c0_i32 = arith.constant 0 : i32
    %c0_i32_0 = arith.constant 0 : i32
    return %arg0, %c0_i32 : i32, i32
  }
  func.func @transform_2(%arg0: i32) -> (i32, i32) {
    %c0_i32 = arith.constant 0 : i32
    %c0_i32_0 = arith.constant 0 : i32
    %c0_i32_1 = arith.constant 0 : i32
    return %c0_i32, %c0_i32_0 : i32, i32
  }
}

</mosaic_0001>

<llo_original>
// kernel: tpu_custom_call.1
$region0: #{tpu_custom_call.1}
  #allocation0 [shape = 'u32[]', space=smem, size = 0x4, offset = 0x4, fixed_abs, tag = 'smem constant byte address 0x4 - core index']
  #allocation1 [shape = 'u32[144,128]{1,0:T(1,128)}', space=vmem, size = 0x12000, scoped, tag = 'internal scratch']
  #allocation2 [shape = 'f32[16,1]{1,0:T(8,128)}', space=vmem, size = 0x2000, scoped, tag = 'scratch operand']
  %s0 = inlined_call_operand.hbm [shape: f32[40,200], index: 0, kind: input, shape index: {}]
  %s1 = inlined_call_operand.hbm [shape: f32[40,200], index: 1, kind: input, shape index: {}]
  %s2 = inlined_call_operand.hbm [shape: f32[1,1], index: 2, kind: output, shape index: {}]
  %s3 = sld [smem:[#allocation0]]
  $region57: #{tpu_custom_call.1} parent=0
    _
  %s5 = ssub.s32 1, %s3
  %s6 = scalar_select 0, %s5, %s3
  $region1: #{tpu_custom_call.1} parent=0
    #allocation3 [shape = 'u8[32768]{0}', space=vmem, size = 0x8000, scoped, tag = 'input window, operand 0']
    #allocation4 [shape = 's32[2]{0}', space=sflag, size = 0x8, scoped, tag = 'scoped memory for tpu_custom_call.1']
    #allocation5 [shape = 's32[2]{0}', space=sflag, size = 0x8, scoped, tag = 'scoped memory for tpu_custom_call.1']
    #allocation6 [shape = 'u8[32768]{0}', space=vmem, size = 0x8000, scoped, tag = 'input window, operand 1']
    #allocation7 [shape = 's32[2]{0}', space=sflag, size = 0x8, scoped, tag = 'scoped memory for tpu_custom_call.1']
    #allocation8 [shape = 'u8[512]{0}', space=smem, size = 0x200, scoped, tag = 'output window, operand 0, single buffered']
    %7 = vsyncpa [#allocation4], 0
    %s8 = scalar_lea.sflag [#allocation4], 1
    %9 = vsyncpa %s8, 0
    %10 = vsyncpa [#allocation7], 0
    %s11 = scalar_lea.sflag [#allocation7], 1
    %12 = vsyncpa %s11, 0
    %13 = vsyncpa [#allocation5], 0
    loop: start=0, step=1, limit=5
    $region2: #{tpu_custom_call.1} parent=1 // loop_pre_header
      _
    $region3: #{tpu_custom_call.1} parent=1 // loop_header
      %s15 = sphi 0, %s19
      %p16 = scmp.ge.s32.totalorder %s15, 5
      %s25 = sphi 0, %s27
      %s28 = sphi 0, %s25
      %s29 = sphi 0, %s28
      %s45 = sphi 0, %s29
      %s51 = sphi 0, %s53
      %s54 = sphi 0, %s51
      %s55 = sphi 0, %s54
      %s71 = sphi 0, %s55
      %s75 = sphi 0, %s75
      %s77 = sphi 0, %s75
      %s78 = sphi 0, %s77
      %s92 = sphi 0, %s78
    $region4: #{tpu_custom_call.1} parent=1 // loop_header_branch
      %18 = sbr.rel (%p16) target = $region8
    $region5: #{tpu_custom_call.1} parent=1 // loop_body
      %s20 = ssub.s32 %s15, 1
      %s21 = ssub.s32 %s15, 2
      %s22 = sadd.s32 %s15, 1
      %s23 = ssub.s32 %s15, %s22
      %p24 = scmp.eq.s32.totalorder %s23, 0
      %s26 = sadd.s32 %s25, 1
      %s27 = scalar_select %p24, %s25, %s26
      %p30 = pneg %p24
      %p31 = scmp.eq.s32.totalorder %s15, 2
      %p32 = por %p30, %p31
      %p33 = scmp.ne.s32.totalorder %s25, %s28
      %p34 = scmp.eq.s32.totalorder %s15, 0
      %p35 = por %p33, %p34
      %p36 = scmp.ne.s32.totalorder %s25, %s28
      %p37 = scmp.eq.s32.totalorder %s20, 2
      %p38 = por %p36, %p37
      %p39 = scmp.ne.s32.totalorder %s28, %s29
      %p40 = scmp.eq.s32.totalorder %s20, 0
      %p41 = por %p39, %p40
      %p42 = scmp.ne.s32.totalorder %s28, %s29
      %p43 = scmp.eq.s32.totalorder %s21, 2
      %p44 = por %p42, %p43
      %p46 = scmp.ne.s32.totalorder %s29, %s45
      %p47 = scmp.eq.s32.totalorder %s21, 0
      %p48 = por %p46, %p47
      %s49 = ssub.s32 %s15, %s22
      %p50 = scmp.eq.s32.totalorder %s49, 0
      %s52 = sadd.s32 %s51, 1
      %s53 = scalar_select %p50, %s51, %s52
      %p56 = pneg %p50
      %p57 = scmp.eq.s32.totalorder %s15, 2
      %p58 = por %p56, %p57
      %p59 = scmp.ne.s32.totalorder %s51, %s54
      %p60 = scmp.eq.s32.totalorder %s15, 0
      %p61 = por %p59, %p60
      %p62 = scmp.ne.s32.totalorder %s51, %s54
      %p63 = scmp.eq.s32.totalorder %s20, 2
      %p64 = por %p62, %p63
      %p65 = scmp.ne.s32.totalorder %s54, %s55
      %p66 = scmp.eq.s32.totalorder %s20, 0
      %p67 = por %p65, %p66
      %p68 = scmp.ne.s32.totalorder %s54, %s55
      %p69 = scmp.eq.s32.totalorder %s21, 2
      %p70 = por %p68, %p69
      %p72 = scmp.ne.s32.totalorder %s55, %s71
      %p73 = scmp.eq.s32.totalorder %s21, 0
      %p74 = por %p72, %p73
      %s76 = sadd.s32 %s75, 1
      %p79 = scmp.eq.s32.totalorder %s15, 2
      %p80 = scmp.ne.s32.totalorder %s75, %s77
      %p81 = scmp.eq.s32.totalorder %s15, 0
      %p82 = por %p80, %p81
      %p83 = scmp.ne.s32.totalorder %s75, %s77
      %p84 = scmp.eq.s32.totalorder %s20, 2
      %p85 = por %p83, %p84
      %p86 = scmp.ne.s32.totalorder %s77, %s78
      %p87 = scmp.eq.s32.totalorder %s20, 0
      %p88 = por %p86, %p87
      %p89 = scmp.ne.s32.totalorder %s77, %s78
      %p90 = scmp.eq.s32.totalorder %s21, 2
      %p91 = por %p89, %p90
      %p93 = scmp.ne.s32.totalorder %s78, %s92
      %p94 = scmp.eq.s32.totalorder %s21, 0
      %p95 = por %p93, %p94
      %p96 = scmp.le.s32.totalorder 1, %s15
      %p97 = scmp.lt.s32.totalorder %s15, 4
      %p98 = pnand %p96, %p97
      %p99 = pneg %p98
      // Predicated region
      $region9: #{tpu_custom_call.1} parent=5 // pred_check
        _
      $region10: #{tpu_custom_call.1} parent=5 // pred_check_branch
        %101 = sbr.rel (%p98) target = $region12
      $region11: #{tpu_custom_call.1} parent=5 // pred_region
        %s102 = ssub.s32 %s15, 1
      $region12: #{tpu_custom_call.1} parent=5 // pred_fallthru
        _
      %p103 = scmp.lt.s32.totalorder %s15, 3
      // Predicated region
      $region13: #{tpu_custom_call.1} parent=5 // pred_check
        %p104 = pneg %p103
      $region14: #{tpu_custom_call.1} parent=5 // pred_check_branch
        %106 = sbr.rel (%p104) target = $region16
      $region15: #{tpu_custom_call.1} parent=5 // pred_region
        // Predicated region
        $region17: #{tpu_custom_call.1} parent=15 // pred_check
          %p107 = pneg %p35
        $region18: #{tpu_custom_call.1} parent=15 // pred_check_branch
          %109 = sbr.rel (%p107) target = $region20
        $region19: #{tpu_custom_call.1} parent=15 // pred_region
          %s110 = sand.u32 %s25, 1
          %s111 = scalar_lea.sflag [#allocation4], %s110
          %s112 = sand.u32 %s25, 1
          %s113 = smul.addr %s112, 32
          %s114 = scalar_lea.vmem [#allocation3], %s113
          %s115 = smul.u32 2, %s15
          %s116 = ssub.s32 5, %s115
          %p117 = scmp.lt.s32.totalorder %s116, 2
          %s118 = scalar_select %p117, %s116, 2
          %s119 = smul.u32 128, %s118
          %s120 = smul.u32 %s119, 2
          %s122 = ssub.s32 512, %s120
          %123 = vsyncadd %s111, %s122
          %p124 = scmp.ne.s32.totalorder 0, %s120
          %s125 = smul.addr %s115, 2
          %s126 = smul.addr %s125, 128
          %s127 = scalar_lea.hbm %s0, %s126
          %s128 = smul.u32 16, %s118
          %s129 = sshll.u32 %s114, 4
          %s130 = int_to_ptr.vmem [resolvable:$true] %s129
          %s131 = sshll.u32 %s128, 4
          %135 = dma.hbm_to_vmem [thread:$0]  (%p124), %s127, %s131, %s130, %s111, 256, 256, 16
        $region20: #{tpu_custom_call.1} parent=15 // pred_fallthru
          _
        // Predicated region
        $region21: #{tpu_custom_call.1} parent=15 // pred_check
          %p136 = pneg %p61
        $region22: #{tpu_custom_call.1} parent=15 // pred_check_branch
          %138 = sbr.rel (%p136) target = $region24
        $region23: #{tpu_custom_call.1} parent=15 // pred_region
          %s139 = sand.u32 %s51, 1
          %s140 = scalar_lea.sflag [#allocation7], %s139
          %s141 = sand.u32 %s51, 1
          %s142 = smul.addr %s141, 32
          %s143 = scalar_lea.vmem [#allocation6], %s142
          %s144 = smul.u32 2, %s15
          %s145 = ssub.s32 5, %s144
          %p146 = scmp.lt.s32.totalorder %s145, 2
          %s147 = scalar_select %p146, %s145, 2
          %s148 = smul.u32 128, %s147
          %s149 = smul.u32 %s148, 2
          %s151 = ssub.s32 512, %s149
          %152 = vsyncadd %s140, %s151
          %p153 = scmp.ne.s32.totalorder 0, %s149
          %s154 = smul.addr %s144, 2
          %s155 = smul.addr %s154, 128
          %s156 = scalar_lea.hbm %s1, %s155
          %s157 = smul.u32 16, %s147
          %s158 = sshll.u32 %s143, 4
          %s159 = int_to_ptr.vmem [resolvable:$true] %s158
          %s160 = sshll.u32 %s157, 4
          %164 = dma.hbm_to_vmem [thread:$0]  (%p153), %s156, %s160, %s159, %s140, 256, 256, 16
        $region24: #{tpu_custom_call.1} parent=15 // pred_fallthru
          _
      $region16: #{tpu_custom_call.1} parent=5 // pred_fallthru
        _
      %p165 = scmp.le.s32.totalorder 1, %s15
      %p166 = scmp.lt.s32.totalorder %s15, 4
      %p167 = pnand %p165, %p166
      %p168 = pneg %p167
      // Predicated region
      $region25: #{tpu_custom_call.1} parent=5 // pred_check
        _
      $region26: #{tpu_custom_call.1} parent=5 // pred_check_branch
        %170 = sbr.rel (%p167) target = $region28
      $region27: #{tpu_custom_call.1} parent=5 // pred_region
        %s171 = ssub.s32 %s15, 1
        %s172 = sand.u32 %s28, 1
        %s173 = scalar_lea.sflag [#allocation4], %s172
        %s174 = sand.u32 %s28, 1
        %s175 = smul.addr %s174, 32
        %s176 = scalar_lea.vmem [#allocation3], %s175
        // Predicated region
        $region29: #{tpu_custom_call.1} parent=27 // pred_check
          %p177 = pneg %p41
        $region30: #{tpu_custom_call.1} parent=27 // pred_check_branch
          %179 = sbr.rel (%p177) target = $region32
        $region31: #{tpu_custom_call.1} parent=27 // pred_region
          %180 = dma.done %s173, 512
        $region32: #{tpu_custom_call.1} parent=27 // pred_fallthru
          _
        %s181 = sand.u32 %s54, 1
        %s182 = scalar_lea.sflag [#allocation7], %s181
        %s183 = sand.u32 %s54, 1
        %s184 = smul.addr %s183, 32
        %s185 = scalar_lea.vmem [#allocation6], %s184
        // Predicated region
        $region33: #{tpu_custom_call.1} parent=27 // pred_check
          %p186 = pneg %p67
        $region34: #{tpu_custom_call.1} parent=27 // pred_check_branch
          %188 = sbr.rel (%p186) target = $region36
        $region35: #{tpu_custom_call.1} parent=27 // pred_region
          %189 = dma.done %s182, 512
        $region36: #{tpu_custom_call.1} parent=27 // pred_fallthru
          _
        %s190 = sand.u32 %s28, 1
        %s191 = scalar_lea.sflag [#allocation4], %s190
        %s192 = sand.u32 %s28, 1
        %s193 = smul.addr %s192, 32
        %s194 = scalar_lea.vmem [#allocation3], %s193
        %p195 = pneg %p41
        %p196 = pneg %p38
        %s197 = sand.u32 %s54, 1
        %s198 = scalar_lea.sflag [#allocation7], %s197
        %s199 = sand.u32 %s54, 1
        %s200 = smul.addr %s199, 32
        %s201 = scalar_lea.vmem [#allocation6], %s200
        %p202 = pneg %p67
        %p203 = pneg %p64
        %p204 = pneg %p88
        %p205 = pneg %p85
        %s206 = smul.u32 2, %s20
        %s207 = ssub.s32 5, %s206
        %p208 = scmp.lt.s32.totalorder %s207, 2
        %s209 = scalar_select %p208, %s207, 2
        %s210 = smul.u32 128, %s209
        %s211 = smul.u32 %s210, 2
        %s212 = smul.u32 2, %s20
        %s213 = ssub.s32 5, %s212
        %p214 = scmp.lt.s32.totalorder %s213, 2
        %s215 = scalar_select %p214, %s213, 2
        %s216 = smul.u32 128, %s215
        %s217 = smul.u32 %s216, 2
        %p218 = scmp.eq.s32.totalorder %s20, 0
        // Predicated region
        $region37: #{tpu_custom_call.1} parent=27 // pred_check
          %p219 = pneg %p218
        $region38: #{tpu_custom_call.1} parent=27 // pred_check_branch
          %221 = sbr.rel (%p219) target = $region40
        $region39: #{tpu_custom_call.1} parent=27 // pred_region
          %vm222 = vcmask 7168
          %223 = vst.msk [vmem:[#allocation2] sm:$0xff] %vm222, 0.0
          %224 = vst.msk [vmem:[#allocation2 + $0x8] sm:$0xff] %vm222, 0.0
        $region40: #{tpu_custom_call.1} parent=27 // pred_fallthru
          _
        %v225 = vld [vmem:[%s176] sm:$0xff]
        %v226 = vld [vmem:[%s176 + $0x8] sm:$0xff]
        %v227 = vld [vmem:[%s176 + $0x10] sm:$0xff]
        %v228 = vld [vmem:[%s176 + $0x18] sm:$0xff]
        %v229 = vld [vmem:[%s185] sm:$0xff]
        %v230 = vld [vmem:[%s185 + $0x8] sm:$0xff]
        %v231 = vld [vmem:[%s185 + $0x10] sm:$0xff]
        %v232 = vld [vmem:[%s185 + $0x18] sm:$0xff]
        %vm233 = vcmask 588800
        %v234 = vsel %vm233, %v226, -inf
        %v235 = vmax.f32 %v225, %v234
        %236 = vmax.xlane.f32.xlu0 %v235
        %v237 = vpop.xlane.xlu0 %236
        %v238 = vsel %vm233, %v228, -inf
        %v239 = vmax.f32 %v227, %v238
        %240 = vmax.xlane.f32.xlu0 %v239
        %v241 = vpop.xlane.xlu0 %240
        %v242 = vsub.f32 %v225, %v237
        %v243 = vsub.f32 %v226, %v237
        %v244 = vsub.f32 %v227, %v241
        %v245 = vsub.f32 %v228, %v241
        %v246 = vmul.f32 %v242, 0.25
        %v247 = vmul.f32 %v243, 0.25
        %v248 = vmul.f32 %v244, 0.25
        %v249 = vmul.f32 %v245, 0.25
        %v250 = vmul.f32 %v246, 1.442695
        %v251 = vpow.pop %v250
        %v252 = vmul.f32 %v247, 1.442695
        %v253 = vpow.pop %v252
        %v254 = vmul.f32 %v248, 1.442695
        %v255 = vpow.pop %v254
        %v256 = vmul.f32 %v249, 1.442695
        %v257 = vpow.pop %v256
        %v258 = vsel %vm233, %v253, 0.0
        %v259 = vadd.f32 %v251, %v258
        %260 = vadd.xlane.f32.xlu0 %v259
        %v261 = vpop.xlane.xlu0 %260
        %v262 = vsel %vm233, %v257, 0.0
        %v263 = vadd.f32 %v255, %v262
        %264 = vadd.xlane.f32.xlu0 %v263
        %v265 = vpop.xlane.xlu0 %264
        %v266 = vlog2.pop %v261
        %v267 = vmul.f32 %v266, 0.6931472
        %v268 = vlog2.pop %v265
        %v269 = vmul.f32 %v268, 0.6931472
        %v270 = vsel %vm233, %v230, -inf
        %v271 = vmax.f32 %v229, %v270
        %272 = vmax.xlane.f32.xlu0 %v271
        %v273 = vpop.xlane.xlu0 %272
        %v274 = vsel %vm233, %v232, -inf
        %v275 = vmax.f32 %v231, %v274
        %276 = vmax.xlane.f32.xlu0 %v275
        %v277 = vpop.xlane.xlu0 %276
        %v278 = vsub.f32 %v229, %v273
        %v279 = vsub.f32 %v230, %v273
        %v280 = vsub.f32 %v231, %v277
        %v281 = vsub.f32 %v232, %v277
        %v282 = vmul.f32 %v278, 0.25
        %v283 = vmul.f32 %v279, 0.25
        %v284 = vmul.f32 %v280, 0.25
        %v285 = vmul.f32 %v281, 0.25
        %v286 = vmul.f32 %v282, 1.442695
        %v287 = vpow.pop %v286
        %v288 = vmul.f32 %v283, 1.442695
        %v289 = vpow.pop %v288
        %v290 = vmul.f32 %v284, 1.442695
        %v291 = vpow.pop %v290
        %v292 = vmul.f32 %v285, 1.442695
        %v293 = vpow.pop %v292
        %v294 = vsel %vm233, %v289, 0.0
        %v295 = vadd.f32 %v287, %v294
        %296 = vadd.xlane.f32.xlu0 %v295
        %v297 = vpop.xlane.xlu0 %296
        %v298 = vsel %vm233, %v293, 0.0
        %v299 = vadd.f32 %v291, %v298
        %300 = vadd.xlane.f32.xlu0 %v299
        %v301 = vpop.xlane.xlu0 %300
        %v302 = vsub.f32 %v282, %v246
        %v303 = vsub.f32 %v283, %v247
        %v304 = vsub.f32 %v284, %v248
        %v305 = vsub.f32 %v285, %v249
        %v306 = vmul.f32 %v287, %v302
        %v307 = vmul.f32 %v289, %v303
        %v308 = vmul.f32 %v291, %v304
        %v309 = vmul.f32 %v293, %v305
        %v310 = vsel %vm233, %v307, 0.0
        %v311 = vadd.f32 %v306, %v310
        %312 = vadd.xlane.f32.xlu0 %v311
        %v313 = vpop.xlane.xlu0 %312
        %v314 = vsel %vm233, %v309, 0.0
        %v315 = vadd.f32 %v308, %v314
        %316 = vadd.xlane.f32.xlu0 %v315
        %v317 = vpop.xlane.xlu0 %316
        %v318 = vrcp.pop %v297
        %v319 = vrcp.pop %v301
        %v320 = vmul.f32 %v313, %v318
        %v321 = vmul.f32 %v317, %v319
        %v322 = vlog2.pop %v297
        %v323 = vmul.f32 %v322, 0.6931472
        %v324 = vlog2.pop %v301
        %v325 = vmul.f32 %v324, 0.6931472
        %v326 = vsub.f32 %v267, %v323
        %v327 = vsub.f32 %v269, %v325
        %v328 = vadd.f32 %v320, %v326
        %v329 = vadd.f32 %v321, %v327
        %s330 = smul.u32 %s20, 16
        %v331 = vlaneseq
        %v332 = vshrl.u32 %v331, 7
        %v333 = vadd.s32 %v332, 8
        %v334 = vstv %s330
        %v335 = vadd.s32 %v334, %v332
        %v336 = vadd.s32 %v334, %v333
        %vm337 = vcmp.lt.s32.totalorder %v335, 40
        %vm338 = vcmp.lt.s32.totalorder %v336, 40
        %v339 = vsel %vm337, %v328, 0.0
        %v340 = vsel %vm338, %v329, 0.0
        %v341 = vld [vmem:[#allocation2] sm:$0xff]
        %v342 = vld [vmem:[#allocation2 + $0x8] sm:$0xff]
        %v343 = vadd.f32 %v341, %v339
        %v344 = vadd.f32 %v342, %v340
        %vm345 = vcmask 7168
        %346 = vst.msk [vmem:[#allocation2] sm:$0xff] %vm345, %v343
        %347 = vst.msk [vmem:[#allocation2 + $0x8] sm:$0xff] %vm345, %v344
        %p348 = scmp.eq.s32.totalorder %s20, 2
        // Predicated region
        $region41: #{tpu_custom_call.1} parent=27 // pred_check
          %p349 = pneg %p348
        $region42: #{tpu_custom_call.1} parent=27 // pred_check_branch
          %351 = sbr.rel (%p349) target = $region44
        $region43: #{tpu_custom_call.1} parent=27 // pred_region
          %v352 = vld [vmem:[#allocation2] sm:$0xff]
          %v353 = vld [vmem:[#allocation2 + $0x8] sm:$0xff]
          %v354 = vsel %vm345, %v352, 0.0
          %v355 = vsel %vm345, %v353, 0.0
          %v356 = vadd.f32 %v354, %v355
          %357 = vadd.xlane.f32.xlu0 %v356
          %v358 = vpop.xlane.xlu0 %357
          %v359 = vrot.slane %v358, 4
          %v360 = vadd.f32 %v358, %v359
          %v361 = vrot.slane %v360, 2
          %v362 = vadd.f32 %v360, %v361
          %v363 = vrot.slane %v362, 1
          %v364 = vadd.f32 %v362, %v363
          %s365 = vtos %v364
          %s366 = smul.f32 %s365, 0.4
          %s367 = scalar_lea.smem [#allocation8], 0
          %368 = sst [smem:[%s367]] %s366
        $region44: #{tpu_custom_call.1} parent=27 // pred_fallthru
          _
        // Predicated region
        $region45: #{tpu_custom_call.1} parent=27 // pred_check
          %p369 = pneg %p85
        $region46: #{tpu_custom_call.1} parent=27 // pred_check_branch
          %371 = sbr.rel (%p369) target = $region48
        $region47: #{tpu_custom_call.1} parent=27 // pred_region
          %s373 = ssub.s32 16, 16
          %374 = vsyncadd [#allocation5], %s373
          %377 = dma.smem_to_hbm [#allocation8], 16, %s2, [#allocation5]
        $region48: #{tpu_custom_call.1} parent=27 // pred_fallthru
          _
        // Predicated region
        $region49: #{tpu_custom_call.1} parent=27 // pred_check
          %p378 = pneg %p85
        $region50: #{tpu_custom_call.1} parent=27 // pred_check_branch
          %380 = sbr.rel (%p378) target = $region52
        $region51: #{tpu_custom_call.1} parent=27 // pred_region
          %381 = dma.done [#allocation5], 16
        $region52: #{tpu_custom_call.1} parent=27 // pred_fallthru
          _
        %382 = sfence
      $region28: #{tpu_custom_call.1} parent=5 // pred_fallthru
        _
      %p383 = scmp.le.s32.totalorder 2, %s15
      // Predicated region
      $region53: #{tpu_custom_call.1} parent=5 // pred_check
        %p384 = pneg %p383
      $region54: #{tpu_custom_call.1} parent=5 // pred_check_branch
        %386 = sbr.rel (%p384) target = $region56
      $region55: #{tpu_custom_call.1} parent=5 // pred_region
        %s387 = ssub.s32 %s15, 2
      $region56: #{tpu_custom_call.1} parent=5 // pred_fallthru
        _
    $region6: #{tpu_custom_call.1} parent=1 // loop_footer
      %s19 = sadd.s32 1, %s15
    $region7: #{tpu_custom_call.1} parent=1 // loop_footer_branch
      %14 = sbr.rel target = $region3
    $region8: #{tpu_custom_call.1} parent=1 // loop_exit
      _
    %388 = vsyncpa [#allocation4], 1
    %s389 = scalar_lea.sflag [#allocation4], 1
    %390 = vsyncpa %s389, 1
    %391 = vsyncpa [#allocation7], 1
    %s392 = scalar_lea.sflag [#allocation7], 1
    %393 = vsyncpa %s392, 1
    %394 = vsyncpa [#allocation5], 1
    %s395 = scalar_lea.sflag [#allocation5], 1
    %396 = vsyncpa %s395, 1

</llo_original>
